<compile_context>
chip_gen: v7x
topology: tpu7x:2x2x1
jax: 0.10.0
libtpu: 0.0.40
codegen_flags: <defaults>
</compile_context>

<pallas_src>
import jax
import jax.numpy as jnp
from jax.experimental import pallas as pl
from jax.experimental.pallas import tpu as pltpu

_EPS = 1e-6      # torch.nn.functional.pairwise_distance default eps (added to the diff)
_THRESH = 0.6    # accuracy threshold from the reference forward()


def _round_up(x: int, m: int) -> int:
    return ((x + m - 1) // m) * m


def _cdiv(a: int, b: int) -> int:
    return (a + b - 1) // b


def _vmem_capacity_bytes() -> int:
    """Physical VMEM per TensorCore; conservative fallback if the query fails."""
    try:
        info = pltpu.get_tpu_info()
        cap = getattr(info, "vmem_capacity_bytes", None)
        if cap:
            return int(cap)
    except Exception:
        pass
    return 64 * 1024 * 1024   # v7x per-core physical VMEM (smallest of the targets)


def _make_contrastive_kernel(margin: float, b_true: int, tb: int):
    margin_f = float(margin)
    thresh_sq = _THRESH * _THRESH

    def kernel(z1_ref, z2_ref, label_ref, loss_ref, corr_ref):
        c = pl.program_id(0)                 # core slice ("parallel")
        k = pl.program_id(1)                 # batch-tile step within the core ("arbitrary")
        steps = pl.num_programs(1)

        # Output blocks are resident across the reduction axis -> use them as the
        # accumulators; zero them on the first step of each core slice.
        @pl.when(k == 0)
        def _init():
            loss_ref[...] = jnp.zeros_like(loss_ref)
            corr_ref[...] = jnp.zeros_like(corr_ref)

        z1 = z1_ref[...].astype(jnp.float32)          # (tb, D)
        z2 = z2_ref[...].astype(jnp.float32)          # (tb, D)
        label = label_ref[...].astype(jnp.float32)    # (tb, 1)

        # pairwise L2 distance with torch's eps added to the difference
        diff = z1 - z2 + _EPS
        dist_sq = jnp.sum(diff * diff, axis=-1, keepdims=True)    # (tb, 1)
        dist = jnp.sqrt(dist_sq)                                  # (tb, 1)

        # contrastive loss: (1-y)*d^2 + y*max(margin-d, 0)^2  ==  d^2 + y*(h^2 - d^2)
        hinge = jnp.maximum(margin_f - dist, 0.0)
        per_pair = dist_sq + label * (hinge * hinge - dist_sq)    # (tb, 1)

        # accuracy: ((dist > 0.6) == label); predicate on the squared distance
        pred = (dist_sq > thresh_sq).astype(jnp.float32)
        correct = (pred == label).astype(jnp.float32)             # (tb, 1)

        # Mask rows past the true batch size.  `tile` is the UNclamped logical tile
        # index, so the partial tail block and any duplicated (clamped) step on the
        # second core contribute exactly zero, even if the padded rows hold NaN/Inf.
        tile = c * steps + k
        row = jax.lax.broadcasted_iota(jnp.int32, dist_sq.shape, 0) + tile * tb
        valid = row < b_true

        part_loss = jnp.sum(jnp.where(valid, per_pair, 0.0), keepdims=True)   # (1, 1)
        part_corr = jnp.sum(jnp.where(valid, correct, 0.0), keepdims=True)    # (1, 1)

        loss_ref[...] += part_loss.reshape(1, 1, 1)   # broadcast over (1, 8, 128)
        corr_ref[...] += part_corr.reshape(1, 1, 1)

    return kernel


def contrastive_loss(z1, z2, label, margin, *, block_rows=None):
    """Pallas TPU implementation of ContrastiveLoss.forward.

    Args:
      z1, z2:     (B, D) float embeddings (f32 or bf16; upcast to f32 in-kernel).
      label:      (B, 1) or (B,) float labels in {0, 1}.
      margin:     python float (static hyperparameter, as in the module __init__).
      block_rows: optional batch-tile override (rounded up to a multiple of 128).

    Returns:
      (loss, acc): two scalar float32 values.
    """
    B, D = z1.shape
    if label.ndim == 1:
        label = label.reshape(B, 1)

    # --- batch tile size: lane-padding-aware VMEM budget ------------------------
    d_pad = _round_up(D, 128)
    # Per batch row, double-buffered:
    #   z1 + z2 : 2 arrays * 2 buffers * d_pad * 4 B
    #   label   : (tb, 1) block pads its lane dim to 128 -> 2 buffers * 512 B
    bytes_per_row = 16 * d_pad + 1024

    vmem_cap = _vmem_capacity_bytes()
    budget = min(vmem_cap // 4, 24 * 1024 * 1024)   # ~24 MiB on v5e/v6e, ~16 MiB on v7x

    if block_rows is None:
        tb = budget // bytes_per_row
        tb = max(128, min(8192, (tb // 128) * 128))
    else:
        tb = max(128, _round_up(int(block_rows), 128))
    if tb >= B:
        tb = B   # single tile; block dims equal the full array dims

    # --- grid: (cores, batch tiles per core); no wrapper padding -----------------
    n_tiles = _cdiv(B, tb)
    num_cores = 2 if n_tiles >= 2 else 1     # uses both TCs on v7x, no-op on v5e/v6e
    steps = _cdiv(n_tiles, num_cores)

    def tile_map(c, k):
        # Clamp so the block index never runs past the last (possibly partial) tile;
        # the in-kernel mask (built from the unclamped index) zeroes any duplicate.
        t = jnp.minimum(c * steps + k, n_tiles - 1)
        return (t, 0)

    out_map = lambda c, k: (c, 0, 0)

    # --- scoped VMEM limit: actual need + headroom, never the whole v7x VMEM -----
    tb8 = _round_up(tb, 8)
    block_bytes = 2 * tb8 * d_pad * 4 + tb8 * 128 * 4       # z1 + z2 + label, one buffer
    vmem_need = 2 * block_bytes + (1 << 20)                  # double-buffered + slack
    vmem_limit = max(vmem_need, 16 * 1024 * 1024) + 4 * 1024 * 1024
    vmem_limit = int(min(vmem_limit, (vmem_cap * 3) // 4))

    kernel = _make_contrastive_kernel(margin, B, tb)

    loss_parts, corr_parts = pl.pallas_call(
        kernel,
        grid=(num_cores, steps),
        in_specs=[
            pl.BlockSpec((tb, D), tile_map),
            pl.BlockSpec((tb, D), tile_map),
            pl.BlockSpec((tb, 1), tile_map),
        ],
        out_specs=[
            pl.BlockSpec((1, 8, 128), out_map),
            pl.BlockSpec((1, 8, 128), out_map),
        ],
        out_shape=[
            jax.ShapeDtypeStruct((num_cores, 8, 128), jnp.float32),
            jax.ShapeDtypeStruct((num_cores, 8, 128), jnp.float32),
        ],
        compiler_params=pltpu.CompilerParams(
            # Core axis is independent -> "parallel" (sharded across v7x TCs);
            # the batch-tile axis carries the running sums -> "arbitrary".
            dimension_semantics=("parallel", "arbitrary"),
            vmem_limit_bytes=vmem_limit,
        ),
    )(z1, z2, label)

    inv_b = 1.0 / float(B)
    loss = jnp.sum(loss_parts[:, 0, 0]) * inv_b
    acc = jnp.sum(corr_parts[:, 0, 0]) * inv_b
    return loss, acc


if __name__ == "__main__":
    key = jax.random.PRNGKey(0)
    k1, k2, k3 = jax.random.split(key, 3)
    margin = 1.0

    def reference(z1, z2, label):
        # Mirrors the PyTorch forward exactly.
        diff = z1 - z2 + _EPS
        dist = jnp.sqrt(jnp.sum(diff * diff, axis=-1, keepdims=True))
        loss = jnp.mean(
            (1.0 - label) * dist ** 2
            + label * jnp.maximum(margin - dist, 0.0) ** 2
        )
        acc = jnp.mean(
            ((dist > _THRESH).astype(jnp.float32) == label).astype(jnp.float32)
        )
        return loss, acc

    # Case 1: multi-tile path.  B=300 with tb=128 gives 3 tiles -> 2 core slices,
    # a masked partial tail block, and one fully-masked duplicated step.
    B, D = 300, 32
    z1 = jax.random.normal(k1, (B, D), dtype=jnp.float32)
    z2 = jax.random.normal(k2, (B, D), dtype=jnp.float32)
    label = jax.random.bernoulli(k3, p=0.5, shape=(B, 1)).astype(jnp.float32)

    loss, acc = contrastive_loss(z1, z2, label, margin, block_rows=128)
    jax.block_until_ready((loss, acc))
    ref_loss, ref_acc = reference(z1, z2, label)
    assert jnp.allclose(loss, ref_loss, rtol=1e-5, atol=1e-6), (loss, ref_loss)
    assert jnp.allclose(acc, ref_acc, rtol=1e-5, atol=1e-6), (acc, ref_acc)

    # Case 2: small batch, default tile heuristic (single full block, one core slice).
    B2, D2 = 20, 32
    z1b = jax.random.normal(k1, (B2, D2), dtype=jnp.float32)
    z2b = jax.random.normal(k2, (B2, D2), dtype=jnp.float32)
    labelb = jax.random.bernoulli(k3, p=0.5, shape=(B2, 1)).astype(jnp.float32)

    loss2, acc2 = contrastive_loss(z1b, z2b, labelb, margin)
    jax.block_until_ready((loss2, acc2))
    ref_loss2, ref_acc2 = reference(z1b, z2b, labelb)
    assert jnp.allclose(loss2, ref_loss2, rtol=1e-5, atol=1e-6), (loss2, ref_loss2)
    assert jnp.allclose(acc2, ref_acc2, rtol=1e-5, atol=1e-6), (acc2, ref_acc2)

    print("KERNEL_OK")
</pallas_src>

<mosaic_0001>
module attributes {stable_mosaic.version = 11 : i64} {
  func.func @kernel(%arg0: i32, %arg1: i32, %arg2: memref<128x32xf32, #tpu.memory_space<vmem>>, %arg3: memref<128x32xf32, #tpu.memory_space<vmem>>, %arg4: memref<128x1xf32, #tpu.memory_space<vmem>>, %arg5: memref<1x8x128xf32, #tpu.memory_space<vmem>>, %arg6: memref<1x8x128xf32, #tpu.memory_space<vmem>>) attributes {dimension_semantics = [#tpu.dimension_semantics<parallel>, #tpu.dimension_semantics<arbitrary>], iteration_bounds = array<i64: 2, 2>, scalar_prefetch = 0 : i64, scratch_operands = 0 : i64, tpu.core_type = #tpu.core_type<tc>, window_params = [{transform_indices = @transform_0, window_bounds = array<i64: 128, 32>}, {transform_indices = @transform_1, window_bounds = array<i64: 128, 32>}, {transform_indices = @transform_2, window_bounds = array<i64: 128, 1>}, {transform_indices = @transform_3, window_bounds = array<i64: 1, 8, 128>}, {transform_indices = @transform_4, window_bounds = array<i64: 1, 8, 128>}]} {
    %c0_i32 = arith.constant 0 : i32
    %0 = arith.cmpi eq, %arg1, %c0_i32 : i32
    %1 = arith.extui %0 : i1 to i32
    %c0_i32_0 = arith.constant 0 : i32
    %2 = arith.cmpi ne, %1, %c0_i32_0 : i32
    scf.if %2 {
      %cst_26 = arith.constant 0.000000e+00 : f32
      %60 = vector.broadcast %cst_26 : f32 to vector<1x8x128xf32>
      %c0_27 = arith.constant 0 : index
      %c0_28 = arith.constant 0 : index
      %c0_29 = arith.constant 0 : index
      %61 = vector.load %arg5[%c0_27, %c0_28, %c0_29] : memref<1x8x128xf32, #tpu.memory_space<vmem>>, vector<1x8x128xf32>
      tpu.vector_store %arg5[%c0_27, %c0_28, %c0_29], %60 {strides = array<i32>} : memref<1x8x128xf32, #tpu.memory_space<vmem>>, vector<1x8x128xf32>,
      %cst_30 = arith.constant 0.000000e+00 : f32
      %62 = vector.broadcast %cst_30 : f32 to vector<1x8x128xf32>
      %c0_31 = arith.constant 0 : index
      %c0_32 = arith.constant 0 : index
      %c0_33 = arith.constant 0 : index
      %63 = vector.load %arg6[%c0_31, %c0_32, %c0_33] : memref<1x8x128xf32, #tpu.memory_space<vmem>>, vector<1x8x128xf32>
      tpu.vector_store %arg6[%c0_31, %c0_32, %c0_33], %62 {strides = array<i32>} : memref<1x8x128xf32, #tpu.memory_space<vmem>>, vector<1x8x128xf32>,
    } else {
    }
    %c0 = arith.constant 0 : index
    %c0_1 = arith.constant 0 : index
    %3 = vector.load %arg2[%c0, %c0_1] : memref<128x32xf32, #tpu.memory_space<vmem>>, vector<128x32xf32>
    %c0_2 = arith.constant 0 : index
    %c0_3 = arith.constant 0 : index
    %4 = vector.load %arg3[%c0_2, %c0_3] : memref<128x32xf32, #tpu.memory_space<vmem>>, vector<128x32xf32>
    %c0_4 = arith.constant 0 : index
    %c0_5 = arith.constant 0 : index
    %5 = vector.load %arg4[%c0_4, %c0_5] : memref<128x1xf32, #tpu.memory_space<vmem>>, vector<128x1xf32>
    %6 = arith.subf %3, %4 : vector<128x32xf32>
    %cst = arith.constant 9.99999997E-7 : f32
    %7 = vector.broadcast %cst : f32 to vector<128x32xf32>
    %8 = arith.addf %6, %7 : vector<128x32xf32>
    %9 = arith.mulf %8, %8 : vector<128x32xf32>
    %cst_6 = arith.constant dense<0.000000e+00> : vector<128xf32>
    %10 = vector.multi_reduction <add>, %9, %cst_6 [1] : vector<128x32xf32> to vector<128xf32>
    %11 = vector.shape_cast %10 : vector<128xf32> to vector<128x1xf32>
    %12 = math.sqrt %11 : vector<128x1xf32>
    %cst_7 = arith.constant 1.000000e+00 : f32
    %13 = vector.broadcast %cst_7 : f32 to vector<128x1xf32>
    %14 = arith.subf %13, %12 : vector<128x1xf32>
    %cst_8 = arith.constant 0.000000e+00 : f32
    %15 = vector.broadcast %cst_8 : f32 to vector<128x1xf32>
    %16 = arith.maximumf %14, %15 : vector<128x1xf32>
    %17 = arith.mulf %16, %16 : vector<128x1xf32>
    %18 = arith.subf %17, %11 : vector<128x1xf32>
    %19 = arith.mulf %5, %18 : vector<128x1xf32>
    %20 = arith.addf %11, %19 : vector<128x1xf32>
    %cst_9 = arith.constant 3.600000e-01 : f32
    %21 = vector.broadcast %cst_9 : f32 to vector<128x1xf32>
    %22 = arith.cmpf ogt, %11, %21 : vector<128x1xf32>
    %23 = arith.extui %22 : vector<128x1xi1> to vector<128x1xi32>
    %24 = arith.sitofp %23 : vector<128x1xi32> to vector<128x1xf32>
    %25 = arith.cmpf oeq, %24, %5 : vector<128x1xf32>
    %26 = arith.extui %25 : vector<128x1xi1> to vector<128x1xi32>
    %27 = arith.sitofp %26 : vector<128x1xi32> to vector<128x1xf32>
    %c2_i32 = arith.constant 2 : i32
    %28 = arith.muli %arg0, %c2_i32 : i32
    %29 = arith.addi %28, %arg1 : i32
    %30 = tpu.iota {dimensions = array<i32: 0>} : vector<128x1xi32>
    %c128_i32 = arith.constant 128 : i32
    %31 = arith.muli %29, %c128_i32 : i32
    %32 = vector.broadcast %31 : i32 to vector<128x1xi32>
    %33 = arith.addi %30, %32 : vector<128x1xi32>
    %c300_i32 = arith.constant 300 : i32
    %34 = vector.broadcast %c300_i32 : i32 to vector<128x1xi32>
    %35 = arith.cmpi slt, %33, %34 : vector<128x1xi32>
    %cst_10 = arith.constant 0.000000e+00 : f32
    %36 = vector.broadcast %cst_10 : f32 to vector<128x1xf32>
    %37 = arith.select %35, %20, %36 : vector<128x1xi1>, vector<128x1xf32>
    %38 = vector.shape_cast %37 : vector<128x1xf32> to vector<1x128x1xf32>
    %cst_11 = arith.constant dense<0.000000e+00> : vector<1xf32>
    %39 = vector.multi_reduction <add>, %38, %cst_11 [1, 2] : vector<1x128x1xf32> to vector<1xf32>
    %40 = vector.shape_cast %39 : vector<1xf32> to vector<1x1x1xf32>
    %41 = vector.extract %40[0, 0, 0] : f32 from vector<1x1x1xf32>
    %42 = vector.broadcast %41 : f32 to vector<1x1xf32>
    %cst_12 = arith.constant 0.000000e+00 : f32
    %43 = vector.broadcast %cst_12 : f32 to vector<128x1xf32>
    %44 = arith.select %35, %27, %43 : vector<128x1xi1>, vector<128x1xf32>
    %45 = vector.shape_cast %44 : vector<128x1xf32> to vector<1x128x1xf32>
    %cst_13 = arith.constant dense<0.000000e+00> : vector<1xf32>
    %46 = vector.multi_reduction <add>, %45, %cst_13 [1, 2] : vector<1x128x1xf32> to vector<1xf32>
    %47 = vector.shape_cast %46 : vector<1xf32> to vector<1x1x1xf32>
    %48 = vector.extract %47[0, 0, 0] : f32 from vector<1x1x1xf32>
    %49 = vector.broadcast %48 : f32 to vector<1x1xf32>
    %c0_14 = arith.constant 0 : index
    %c0_15 = arith.constant 0 : index
    %c0_16 = arith.constant 0 : index
    %50 = vector.load %arg5[%c0_14, %c0_15, %c0_16] : memref<1x8x128xf32, #tpu.memory_space<vmem>>, vector<1x8x128xf32>
    %51 = vector.shape_cast %42 : vector<1x1xf32> to vector<1x1x1xf32>
    %52 = vector.broadcast %51 : vector<1x1x1xf32> to vector<1x8x128xf32>
    %53 = arith.addf %50, %52 : vector<1x8x128xf32>
    %c0_17 = arith.constant 0 : index
    %c0_18 = arith.constant 0 : index
    %c0_19 = arith.constant 0 : index
    %54 = vector.load %arg5[%c0_17, %c0_18, %c0_19] : memref<1x8x128xf32, #tpu.memory_space<vmem>>, vector<1x8x128xf32>
    tpu.vector_store %arg5[%c0_17, %c0_18, %c0_19], %53 {strides = array<i32>} : memref<1x8x128xf32, #tpu.memory_space<vmem>>, vector<1x8x128xf32>,
    %c0_20 = arith.constant 0 : index
    %c0_21 = arith.constant 0 : index
    %c0_22 = arith.constant 0 : index
    %55 = vector.load %arg6[%c0_20, %c0_21, %c0_22] : memref<1x8x128xf32, #tpu.memory_space<vmem>>, vector<1x8x128xf32>
    %56 = vector.shape_cast %49 : vector<1x1xf32> to vector<1x1x1xf32>
    %57 = vector.broadcast %56 : vector<1x1x1xf32> to vector<1x8x128xf32>
    %58 = arith.addf %55, %57 : vector<1x8x128xf32>
    %c0_23 = arith.constant 0 : index
    %c0_24 = arith.constant 0 : index
    %c0_25 = arith.constant 0 : index
    %59 = vector.load %arg6[%c0_23, %c0_24, %c0_25] : memref<1x8x128xf32, #tpu.memory_space<vmem>>, vector<1x8x128xf32>
    tpu.vector_store %arg6[%c0_23, %c0_24, %c0_25], %58 {strides = array<i32>} : memref<1x8x128xf32, #tpu.memory_space<vmem>>, vector<1x8x128xf32>,
    return
  }
  func.func @transform_0(%arg0: i32, %arg1: i32) -> (i32, i32) {
    %c2_i32 = arith.constant 2 : i32
    %0 = arith.muli %arg0, %c2_i32 : i32
    %1 = arith.addi %0, %arg1 : i32
    %c2_i32_0 = arith.constant 2 : i32
    %2 = arith.minsi %1, %c2_i32_0 : i32
    %c0_i32 = arith.constant 0 : i32
    %c0_i32_1 = arith.constant 0 : i32
    return %2, %c0_i32 : i32, i32
  }
  func.func @transform_1(%arg0: i32, %arg1: i32) -> (i32, i32) {
    %c2_i32 = arith.constant 2 : i32
    %0 = arith.muli %arg0, %c2_i32 : i32
    %1 = arith.addi %0, %arg1 : i32
    %c2_i32_0 = arith.constant 2 : i32
    %2 = arith.minsi %1, %c2_i32_0 : i32
    %c0_i32 = arith.constant 0 : i32
    %c0_i32_1 = arith.constant 0 : i32
    return %2, %c0_i32 : i32, i32
  }
  func.func @transform_2(%arg0: i32, %arg1: i32) -> (i32, i32) {
    %c2_i32 = arith.constant 2 : i32
    %0 = arith.muli %arg0, %c2_i32 : i32
    %1 = arith.addi %0, %arg1 : i32
    %c2_i32_0 = arith.constant 2 : i32
    %2 = arith.minsi %1, %c2_i32_0 : i32
    %c0_i32 = arith.constant 0 : i32
    %c0_i32_1 = arith.constant 0 : i32
    return %2, %c0_i32 : i32, i32
  }
  func.func @transform_3(%arg0: i32, %arg1: i32) -> (i32, i32, i32) {
    %c0_i32 = arith.constant 0 : i32
    %c0_i32_0 = arith.constant 0 : i32
    %c0_i32_1 = arith.constant 0 : i32
    return %arg0, %c0_i32, %c0_i32_0 : i32, i32, i32
  }
  func.func @transform_4(%arg0: i32, %arg1: i32) -> (i32, i32, i32) {
    %c0_i32 = arith.constant 0 : i32
    %c0_i32_0 = arith.constant 0 : i32
    %c0_i32_1 = arith.constant 0 : i32
    return %arg0, %c0_i32, %c0_i32_0 : i32, i32, i32
  }
}

</mosaic_0001>

<llo_original>
// kernel: tpu_custom_call.1
$region0: #{tpu_custom_call.1}
  #allocation0 [shape = 'u32[]', space=smem, size = 0x4, offset = 0x4, fixed_abs, tag = 'smem constant byte address 0x4 - core index']
  #allocation1 [shape = 'u32[144,128]{1,0:T(1,128)}', space=vmem, size = 0x12000, scoped, tag = 'internal scratch']
  %s0 = inlined_call_operand.vmem [shape: f32[300,32], index: 0, kind: input, shape index: {}]
  %s1 = inlined_call_operand.vmem [shape: f32[300,32], index: 1, kind: input, shape index: {}]
  %s2 = inlined_call_operand.vmem [shape: f32[300,1], index: 2, kind: input, shape index: {}]
  %s3 = inlined_call_operand.hbm [shape: f32[2,8,128], index: 3, kind: output, shape index: {0}]
  %s4 = inlined_call_operand.hbm [shape: f32[2,8,128], index: 4, kind: output, shape index: {1}]
  %5 = xla_tuple %s3, %s4
  %s6 = sld [smem:[#allocation0]]
  $region57: #{tpu_custom_call.1} parent=0
    _
  %s8 = ssub.s32 1, %s6
  %s9 = scalar_select 0, %s8, %s6
  $region1: #{tpu_custom_call.1} parent=0
    #allocation2 [shape = 'u8[8192]{0}', space=vmem, size = 0x2000, scoped, tag = 'output window, operand 0']
    #allocation3 [shape = 's32[2]{0}', space=sflag, size = 0x8, scoped, tag = 'scoped memory for tpu_custom_call.1']
    #allocation4 [shape = 'u8[8192]{0}', space=vmem, size = 0x2000, scoped, tag = 'output window, operand 1']
    #allocation5 [shape = 's32[2]{0}', space=sflag, size = 0x8, scoped, tag = 'scoped memory for tpu_custom_call.1']
    %10 = vsyncpa [#allocation3], 0
    %s11 = scalar_lea.sflag [#allocation3], 1
    %12 = vsyncpa %s11, 0
    %13 = vsyncpa [#allocation5], 0
    %s14 = scalar_lea.sflag [#allocation5], 1
    %15 = vsyncpa %s14, 0
    loop: start=0, step=1, limit=6
    $region2: #{tpu_custom_call.1} parent=1 // loop_pre_header
      _
    $region3: #{tpu_custom_call.1} parent=1 // loop_header
      %s17 = sphi 0, %s21
      %p18 = scmp.ge.s32.totalorder %s17, 6
      %s24 = sphi 0, %s36
      %s25 = sphi 0, %s32
      %s26 = sphi 0, %s24
      %s27 = sphi 0, %s25
      %s28 = sphi 0, %s26
      %s29 = sphi 0, %s27
      %s47 = sphi 0, %s49
      %s50 = sphi 0, %s47
      %s51 = sphi 0, %s50
      %s67 = sphi 0, %s51
      %s81 = sphi 0, %s83
      %s84 = sphi 0, %s81
      %s85 = sphi 0, %s84
      %s101 = sphi 0, %s85
      %s115 = sphi 0, %s117
      %s118 = sphi 0, %s115
      %s119 = sphi 0, %s118
      %s135 = sphi 0, %s119
      %s141 = sphi 0, %s143
      %s144 = sphi 0, %s141
      %s145 = sphi 0, %s144
      %s161 = sphi 0, %s145
      %s167 = sphi 0, %s169
      %s170 = sphi 0, %s167
      %s171 = sphi 0, %s170
      %s187 = sphi 0, %s171
    $region4: #{tpu_custom_call.1} parent=1 // loop_header_branch
      %20 = sbr.rel (%p18) target = $region8
    $region5: #{tpu_custom_call.1} parent=1 // loop_body
      %s22 = ssub.s32 %s17, 1
      %s23 = ssub.s32 %s17, 2
      %s30 = sadd.s32 1, %s25
      %p31 = scmp.ge.s32.totalorder %s30, 2
      %s32 = scalar_select %p31, 0, %s30
      %s33 = sadd.s32 1, %s24
      %s34 = scalar_select %p31, %s33, %s24
      %p35 = scmp.ge.s32.totalorder %s34, 2
      %s36 = scalar_select %p35, 0, %s34
      %s37 = smul.u32 %s24, 2
      %s38 = sadd.s32 %s37, %s25
      %p39 = scmp.lt.s32.totalorder %s38, 2
      %s40 = scalar_select %p39, %s38, 2
      %s41 = smul.u32 %s36, 2
      %s42 = sadd.s32 %s41, %s32
      %p43 = scmp.lt.s32.totalorder %s42, 2
      %s44 = scalar_select %p43, %s42, 2
      %s45 = ssub.s32 %s40, %s44
      %p46 = scmp.eq.s32.totalorder %s45, 0
      %s48 = sadd.s32 %s47, 1
      %s49 = scalar_select %p46, %s47, %s48
      %p52 = pneg %p46
      %p53 = scmp.eq.s32.totalorder %s17, 3
      %p54 = por %p52, %p53
      %p55 = scmp.ne.s32.totalorder %s47, %s50
      %p56 = scmp.eq.s32.totalorder %s17, 0
      %p57 = por %p55, %p56
      %p58 = scmp.ne.s32.totalorder %s47, %s50
      %p59 = scmp.eq.s32.totalorder %s22, 3
      %p60 = por %p58, %p59
      %p61 = scmp.ne.s32.totalorder %s50, %s51
      %p62 = scmp.eq.s32.totalorder %s22, 0
      %p63 = por %p61, %p62
      %p64 = scmp.ne.s32.totalorder %s50, %s51
      %p65 = scmp.eq.s32.totalorder %s23, 3
      %p66 = por %p64, %p65
      %p68 = scmp.ne.s32.totalorder %s51, %s67
      %p69 = scmp.eq.s32.totalorder %s23, 0
      %p70 = por %p68, %p69
      %s71 = smul.u32 %s24, 2
      %s72 = sadd.s32 %s71, %s25
      %p73 = scmp.lt.s32.totalorder %s72, 2
      %s74 = scalar_select %p73, %s72, 2
      %s75 = smul.u32 %s36, 2
      %s76 = sadd.s32 %s75, %s32
      %p77 = scmp.lt.s32.totalorder %s76, 2
      %s78 = scalar_select %p77, %s76, 2
      %s79 = ssub.s32 %s74, %s78
      %p80 = scmp.eq.s32.totalorder %s79, 0
      %s82 = sadd.s32 %s81, 1
      %s83 = scalar_select %p80, %s81, %s82
      %p86 = pneg %p80
      %p87 = scmp.eq.s32.totalorder %s17, 3
      %p88 = por %p86, %p87
      %p89 = scmp.ne.s32.totalorder %s81, %s84
      %p90 = scmp.eq.s32.totalorder %s17, 0
      %p91 = por %p89, %p90
      %p92 = scmp.ne.s32.totalorder %s81, %s84
      %p93 = scmp.eq.s32.totalorder %s22, 3
      %p94 = por %p92, %p93
      %p95 = scmp.ne.s32.totalorder %s84, %s85
      %p96 = scmp.eq.s32.totalorder %s22, 0
      %p97 = por %p95, %p96
      %p98 = scmp.ne.s32.totalorder %s84, %s85
      %p99 = scmp.eq.s32.totalorder %s23, 3
      %p100 = por %p98, %p99
      %p102 = scmp.ne.s32.totalorder %s85, %s101
      %p103 = scmp.eq.s32.totalorder %s23, 0
      %p104 = por %p102, %p103
      %s105 = smul.u32 %s24, 2
      %s106 = sadd.s32 %s105, %s25
      %p107 = scmp.lt.s32.totalorder %s106, 2
      %s108 = scalar_select %p107, %s106, 2
      %s109 = smul.u32 %s36, 2
      %s110 = sadd.s32 %s109, %s32
      %p111 = scmp.lt.s32.totalorder %s110, 2
      %s112 = scalar_select %p111, %s110, 2
      %s113 = ssub.s32 %s108, %s112
      %p114 = scmp.eq.s32.totalorder %s113, 0
      %s116 = sadd.s32 %s115, 1
      %s117 = scalar_select %p114, %s115, %s116
      %p120 = pneg %p114
      %p121 = scmp.eq.s32.totalorder %s17, 3
      %p122 = por %p120, %p121
      %p123 = scmp.ne.s32.totalorder %s115, %s118
      %p124 = scmp.eq.s32.totalorder %s17, 0
      %p125 = por %p123, %p124
      %p126 = scmp.ne.s32.totalorder %s115, %s118
      %p127 = scmp.eq.s32.totalorder %s22, 3
      %p128 = por %p126, %p127
      %p129 = scmp.ne.s32.totalorder %s118, %s119
      %p130 = scmp.eq.s32.totalorder %s22, 0
      %p131 = por %p129, %p130
      %p132 = scmp.ne.s32.totalorder %s118, %s119
      %p133 = scmp.eq.s32.totalorder %s23, 3
      %p134 = por %p132, %p133
      %p136 = scmp.ne.s32.totalorder %s119, %s135
      %p137 = scmp.eq.s32.totalorder %s23, 0
      %p138 = por %p136, %p137
      %s139 = ssub.s32 %s24, %s36
      %p140 = scmp.eq.s32.totalorder %s139, 0
      %s142 = sadd.s32 %s141, 1
      %s143 = scalar_select %p140, %s141, %s142
      %p146 = pneg %p140
      %p147 = scmp.eq.s32.totalorder %s17, 3
      %p148 = por %p146, %p147
      %p149 = scmp.ne.s32.totalorder %s141, %s144
      %p150 = scmp.eq.s32.totalorder %s17, 0
      %p151 = por %p149, %p150
      %p152 = scmp.ne.s32.totalorder %s141, %s144
      %p153 = scmp.eq.s32.totalorder %s22, 3
      %p154 = por %p152, %p153
      %p155 = scmp.ne.s32.totalorder %s144, %s145
      %p156 = scmp.eq.s32.totalorder %s22, 0
      %p157 = por %p155, %p156
      %p158 = scmp.ne.s32.totalorder %s144, %s145
      %p159 = scmp.eq.s32.totalorder %s23, 3
      %p160 = por %p158, %p159
      %p162 = scmp.ne.s32.totalorder %s145, %s161
      %p163 = scmp.eq.s32.totalorder %s23, 0
      %p164 = por %p162, %p163
      %s165 = ssub.s32 %s24, %s36
      %p166 = scmp.eq.s32.totalorder %s165, 0
      %s168 = sadd.s32 %s167, 1
      %s169 = scalar_select %p166, %s167, %s168
      %p172 = pneg %p166
      %p173 = scmp.eq.s32.totalorder %s17, 3
      %p174 = por %p172, %p173
      %p175 = scmp.ne.s32.totalorder %s167, %s170
      %p176 = scmp.eq.s32.totalorder %s17, 0
      %p177 = por %p175, %p176
      %p178 = scmp.ne.s32.totalorder %s167, %s170
      %p179 = scmp.eq.s32.totalorder %s22, 3
      %p180 = por %p178, %p179
      %p181 = scmp.ne.s32.totalorder %s170, %s171
      %p182 = scmp.eq.s32.totalorder %s22, 0
      %p183 = por %p181, %p182
      %p184 = scmp.ne.s32.totalorder %s170, %s171
      %p185 = scmp.eq.s32.totalorder %s23, 3
      %p186 = por %p184, %p185
      %p188 = scmp.ne.s32.totalorder %s171, %s187
      %p189 = scmp.eq.s32.totalorder %s23, 0
      %p190 = por %p188, %p189
      %p191 = scmp.le.s32.totalorder 1, %s17
      %p192 = scmp.lt.s32.totalorder %s17, 5
      %p193 = pnand %p191, %p192
      %p194 = pneg %p193
      // Predicated region
      $region9: #{tpu_custom_call.1} parent=5 // pred_check
        _
      $region10: #{tpu_custom_call.1} parent=5 // pred_check_branch
        %196 = sbr.rel (%p193) target = $region12
      $region11: #{tpu_custom_call.1} parent=5 // pred_region
        %s197 = ssub.s32 %s17, 1
      $region12: #{tpu_custom_call.1} parent=5 // pred_fallthru
        _
      %p198 = scmp.lt.s32.totalorder %s17, 4
      // Predicated region
      $region13: #{tpu_custom_call.1} parent=5 // pred_check
        %p199 = pneg %p198
      $region14: #{tpu_custom_call.1} parent=5 // pred_check_branch
        %201 = sbr.rel (%p199) target = $region16
      $region15: #{tpu_custom_call.1} parent=5 // pred_region
        // Predicated region
        $region17: #{tpu_custom_call.1} parent=15 // pred_check
          %p202 = pneg %p57
        $region18: #{tpu_custom_call.1} parent=15 // pred_check_branch
          %204 = sbr.rel (%p202) target = $region20
        $region19: #{tpu_custom_call.1} parent=15 // pred_region
          %s205 = smul.u32 %s24, 2
          %s206 = sadd.s32 %s205, %s25
          %p207 = scmp.lt.s32.totalorder %s206, 2
          %s208 = scalar_select %p207, %s206, 2
          %s209 = smul.u32 16, %s208
          %s210 = ssub.s32 38, %s209
          %p211 = scmp.lt.s32.totalorder %s210, 16
          %s212 = scalar_select %p211, %s210, 16
          %s213 = smul.u32 128, %s212
          %p214 = scmp.lt.s32.totalorder %s209, 37
          %s215 = scalar_select %p214, %s209, 37
          %s216 = smul.addr %s215, 8
          %s217 = scalar_lea.vmem %s0, %s216
          %s218 = smul.u32 %s24, 2
          %s219 = sadd.s32 %s218, %s25
          %p220 = scmp.lt.s32.totalorder %s219, 2
          %s221 = scalar_select %p220, %s219, 2
          %s222 = smul.u32 16, %s221
          %s223 = ssub.s32 38, %s222
          %p224 = scmp.lt.s32.totalorder %s223, 16
          %s225 = scalar_select %p224, %s223, 16
          %s226 = smul.u32 128, %s225
        $region20: #{tpu_custom_call.1} parent=15 // pred_fallthru
          _
        // Predicated region
        $region21: #{tpu_custom_call.1} parent=15 // pred_check
          %p227 = pneg %p91
        $region22: #{tpu_custom_call.1} parent=15 // pred_check_branch
          %229 = sbr.rel (%p227) target = $region24
        $region23: #{tpu_custom_call.1} parent=15 // pred_region
          %s230 = smul.u32 %s24, 2
          %s231 = sadd.s32 %s230, %s25
          %p232 = scmp.lt.s32.totalorder %s231, 2
          %s233 = scalar_select %p232, %s231, 2
          %s234 = smul.u32 16, %s233
          %s235 = ssub.s32 38, %s234
          %p236 = scmp.lt.s32.totalorder %s235, 16
          %s237 = scalar_select %p236, %s235, 16
          %s238 = smul.u32 128, %s237
          %p239 = scmp.lt.s32.totalorder %s234, 37
          %s240 = scalar_select %p239, %s234, 37
          %s241 = smul.addr %s240, 8
          %s242 = scalar_lea.vmem %s1, %s241
          %s243 = smul.u32 %s24, 2
          %s244 = sadd.s32 %s243, %s25
          %p245 = scmp.lt.s32.totalorder %s244, 2
          %s246 = scalar_select %p245, %s244, 2
          %s247 = smul.u32 16, %s246
          %s248 = ssub.s32 38, %s247
          %p249 = scmp.lt.s32.totalorder %s248, 16
          %s250 = scalar_select %p249, %s248, 16
          %s251 = smul.u32 128, %s250
        $region24: #{tpu_custom_call.1} parent=15 // pred_fallthru
          _
        // Predicated region
        $region25: #{tpu_custom_call.1} parent=15 // pred_check
          %p252 = pneg %p125
        $region26: #{tpu_custom_call.1} parent=15 // pred_check_branch
          %254 = sbr.rel (%p252) target = $region28
        $region27: #{tpu_custom_call.1} parent=15 // pred_region
          %s255 = smul.u32 %s24, 2
          %s256 = sadd.s32 %s255, %s25
          %p257 = scmp.lt.s32.totalorder %s256, 2
          %s258 = scalar_select %p257, %s256, 2
          %s259 = smul.u32 16, %s258
          %s260 = ssub.s32 38, %s259
          %p261 = scmp.lt.s32.totalorder %s260, 16
          %s262 = scalar_select %p261, %s260, 16
          %s263 = smul.u32 128, %s262
          %p264 = scmp.lt.s32.totalorder %s259, 37
          %s265 = scalar_select %p264, %s259, 37
          %s266 = smul.addr %s265, 8
          %s267 = scalar_lea.vmem %s2, %s266
          %s268 = smul.u32 %s24, 2
          %s269 = sadd.s32 %s268, %s25
          %p270 = scmp.lt.s32.totalorder %s269, 2
          %s271 = scalar_select %p270, %s269, 2
          %s272 = smul.u32 16, %s271
          %s273 = ssub.s32 38, %s272
          %p274 = scmp.lt.s32.totalorder %s273, 16
          %s275 = scalar_select %p274, %s273, 16
          %s276 = smul.u32 128, %s275
        $region28: #{tpu_custom_call.1} parent=15 // pred_fallthru
          _
      $region16: #{tpu_custom_call.1} parent=5 // pred_fallthru
        _
      %p277 = scmp.le.s32.totalorder 1, %s17
      %p278 = scmp.lt.s32.totalorder %s17, 5
      %p279 = pnand %p277, %p278
      %p280 = pneg %p279
      // Predicated region
      $region29: #{tpu_custom_call.1} parent=5 // pred_check
        _
      $region30: #{tpu_custom_call.1} parent=5 // pred_check_branch
        %282 = sbr.rel (%p279) target = $region32
      $region31: #{tpu_custom_call.1} parent=5 // pred_region
        %s283 = ssub.s32 %s17, 1
        %s284 = smul.u32 %s26, 2
        %s285 = sadd.s32 %s284, %s27
        %p286 = scmp.lt.s32.totalorder %s285, 2
        %s287 = scalar_select %p286, %s285, 2
        %s288 = smul.u32 16, %s287
        %s289 = ssub.s32 38, %s288
        %p290 = scmp.lt.s32.totalorder %s289, 16
        %s291 = scalar_select %p290, %s289, 16
        %s292 = smul.u32 128, %s291
        %p293 = scmp.lt.s32.totalorder %s288, 37
        %s294 = scalar_select %p293, %s288, 37
        %s295 = smul.addr %s294, 8
        %s296 = scalar_lea.vmem %s0, %s295
        %p297 = pneg %p63
        %p298 = pneg %p60
        %s299 = smul.u32 %s26, 2
        %s300 = sadd.s32 %s299, %s27
        %p301 = scmp.lt.s32.totalorder %s300, 2
        %s302 = scalar_select %p301, %s300, 2
        %s303 = smul.u32 16, %s302
        %s304 = ssub.s32 38, %s303
        %p305 = scmp.lt.s32.totalorder %s304, 16
        %s306 = scalar_select %p305, %s304, 16
        %s307 = smul.u32 128, %s306
        %p308 = scmp.lt.s32.totalorder %s303, 37
        %s309 = scalar_select %p308, %s303, 37
        %s310 = smul.addr %s309, 8
        %s311 = scalar_lea.vmem %s1, %s310
        %p312 = pneg %p97
        %p313 = pneg %p94
        %s314 = smul.u32 %s26, 2
        %s315 = sadd.s32 %s314, %s27
        %p316 = scmp.lt.s32.totalorder %s315, 2
        %s317 = scalar_select %p316, %s315, 2
        %s318 = smul.u32 16, %s317
        %s319 = ssub.s32 38, %s318
        %p320 = scmp.lt.s32.totalorder %s319, 16
        %s321 = scalar_select %p320, %s319, 16
        %s322 = smul.u32 128, %s321
        %p323 = scmp.lt.s32.totalorder %s318, 37
        %s324 = scalar_select %p323, %s318, 37
        %s325 = smul.addr %s324, 8
        %s326 = scalar_lea.vmem %s2, %s325
        %p327 = pneg %p131
        %p328 = pneg %p128
        %p329 = pneg %p157
        %p330 = pneg %p154
        %s331 = sand.u32 %s144, 1
        %s332 = scalar_lea.sflag [#allocation3], %s331
        %s333 = sand.u32 %s144, 1
        %s334 = smul.addr %s333, 8
        %s335 = scalar_lea.vmem [#allocation2], %s334
        %p336 = pneg %p183
        %p337 = pneg %p180
        %s338 = sand.u32 %s170, 1
        %s339 = scalar_lea.sflag [#allocation5], %s338
        %s340 = sand.u32 %s170, 1
        %s341 = smul.addr %s340, 8
        %s342 = scalar_lea.vmem [#allocation4], %s341
        %s343 = smul.u32 %s26, 2
        %s344 = sadd.s32 %s343, %s27
        %p345 = scmp.lt.s32.totalorder %s344, 2
        %s346 = scalar_select %p345, %s344, 2
        %s347 = smul.u32 16, %s346
        %s348 = ssub.s32 38, %s347
        %p349 = scmp.lt.s32.totalorder %s348, 16
        %s350 = scalar_select %p349, %s348, 16
        %s351 = smul.u32 128, %s350
        %p352 = scmp.lt.s32.totalorder %s347, 37
        %s353 = scalar_select %p352, %s347, 37
        %s354 = smul.addr %s353, 8
        %s355 = scalar_lea.vmem %s0, %s354
        %s356 = smul.u32 %s26, 2
        %s357 = sadd.s32 %s356, %s27
        %p358 = scmp.lt.s32.totalorder %s357, 2
        %s359 = scalar_select %p358, %s357, 2
        %s360 = smul.u32 16, %s359
        %s361 = ssub.s32 38, %s360
        %p362 = scmp.lt.s32.totalorder %s361, 16
        %s363 = scalar_select %p362, %s361, 16
        %s364 = smul.u32 128, %s363
        %s365 = smul.u32 %s26, 2
        %s366 = sadd.s32 %s365, %s27
        %p367 = scmp.lt.s32.totalorder %s366, 2
        %s368 = scalar_select %p367, %s366, 2
        %s369 = smul.u32 16, %s368
        %s370 = ssub.s32 38, %s369
        %p371 = scmp.lt.s32.totalorder %s370, 16
        %s372 = scalar_select %p371, %s370, 16
        %s373 = smul.u32 128, %s372
        %p374 = scmp.lt.s32.totalorder %s369, 37
        %s375 = scalar_select %p374, %s369, 37
        %s376 = smul.addr %s375, 8
        %s377 = scalar_lea.vmem %s1, %s376
        %s378 = smul.u32 %s26, 2
        %s379 = sadd.s32 %s378, %s27
        %p380 = scmp.lt.s32.totalorder %s379, 2
        %s381 = scalar_select %p380, %s379, 2
        %s382 = smul.u32 16, %s381
        %s383 = ssub.s32 38, %s382
        %p384 = scmp.lt.s32.totalorder %s383, 16
        %s385 = scalar_select %p384, %s383, 16
        %s386 = smul.u32 128, %s385
        %s387 = smul.u32 %s26, 2
        %s388 = sadd.s32 %s387, %s27
        %p389 = scmp.lt.s32.totalorder %s388, 2
        %s390 = scalar_select %p389, %s388, 2
        %s391 = smul.u32 16, %s390
        %s392 = ssub.s32 38, %s391
        %p393 = scmp.lt.s32.totalorder %s392, 16
        %s394 = scalar_select %p393, %s392, 16
        %s395 = smul.u32 128, %s394
        %p396 = scmp.lt.s32.totalorder %s391, 37
        %s397 = scalar_select %p396, %s391, 37
        %s398 = smul.addr %s397, 8
        %s399 = scalar_lea.vmem %s2, %s398
        %s400 = smul.u32 %s26, 2
        %s401 = sadd.s32 %s400, %s27
        %p402 = scmp.lt.s32.totalorder %s401, 2
        %s403 = scalar_select %p402, %s401, 2
        %s404 = smul.u32 16, %s403
        %s405 = ssub.s32 38, %s404
        %p406 = scmp.lt.s32.totalorder %s405, 16
        %s407 = scalar_select %p406, %s405, 16
        %s408 = smul.u32 128, %s407
        %p409 = scmp.eq.s32.totalorder %s27, 0
        // Predicated region
        $region33: #{tpu_custom_call.1} parent=31 // pred_check
          %p410 = pneg %p409
        $region34: #{tpu_custom_call.1} parent=31 // pred_check_branch
          %412 = sbr.rel (%p410) target = $region36
        $region35: #{tpu_custom_call.1} parent=31 // pred_region
          %413 = vst [vmem:[%s335] sm:$0xff] 0.0
          %414 = vst [vmem:[%s342] sm:$0xff] 0.0
        $region36: #{tpu_custom_call.1} parent=31 // pred_fallthru
          _
        %v415 = vld [vmem:[%s355] sm:$0xff]
        %v416 = vld [vmem:[%s355 + $0x8] sm:$0xff]
        %v417 = vld [vmem:[%s355 + $0x10] sm:$0xff]
        %v418 = vld [vmem:[%s355 + $0x18] sm:$0xff]
        %v419 = vld [vmem:[%s355 + $0x20] sm:$0xff]
        %v420 = vld [vmem:[%s355 + $0x28] sm:$0xff]
        %v421 = vld [vmem:[%s355 + $0x30] sm:$0xff]
        %v422 = vld [vmem:[%s355 + $0x38] sm:$0xff]
        %v423 = vld [vmem:[%s355 + $0x40] sm:$0xff]
        %v424 = vld [vmem:[%s355 + $0x48] sm:$0xff]
        %v425 = vld [vmem:[%s355 + $0x50] sm:$0xff]
        %v426 = vld [vmem:[%s355 + $0x58] sm:$0xff]
        %v427 = vld [vmem:[%s355 + $0x60] sm:$0xff]
        %v428 = vld [vmem:[%s355 + $0x68] sm:$0xff]
        %v429 = vld [vmem:[%s355 + $0x70] sm:$0xff]
        %v430 = vld [vmem:[%s355 + $0x78] sm:$0xff]
        %v431 = vld [vmem:[%s377] sm:$0xff]
        %v432 = vld [vmem:[%s377 + $0x8] sm:$0xff]
        %v433 = vld [vmem:[%s377 + $0x10] sm:$0xff]
        %v434 = vld [vmem:[%s377 + $0x18] sm:$0xff]
        %v435 = vld [vmem:[%s377 + $0x20] sm:$0xff]
        %v436 = vld [vmem:[%s377 + $0x28] sm:$0xff]
        %v437 = vld [vmem:[%s377 + $0x30] sm:$0xff]
        %v438 = vld [vmem:[%s377 + $0x38] sm:$0xff]
        %v439 = vld [vmem:[%s377 + $0x40] sm:$0xff]
        %v440 = vld [vmem:[%s377 + $0x48] sm:$0xff]
        %v441 = vld [vmem:[%s377 + $0x50] sm:$0xff]
        %v442 = vld [vmem:[%s377 + $0x58] sm:$0xff]
        %v443 = vld [vmem:[%s377 + $0x60] sm:$0xff]
        %v444 = vld [vmem:[%s377 + $0x68] sm:$0xff]
        %v445 = vld [vmem:[%s377 + $0x70] sm:$0xff]
        %v446 = vld [vmem:[%s377 + $0x78] sm:$0xff]
        %v447 = vld [vmem:[%s399] sm:$0xff]
        %v448 = vld [vmem:[%s399 + $0x8] sm:$0xff]
        %v449 = vld [vmem:[%s399 + $0x10] sm:$0xff]
        %v450 = vld [vmem:[%s399 + $0x18] sm:$0xff]
        %v451 = vld [vmem:[%s399 + $0x20] sm:$0xff]
        %v452 = vld [vmem:[%s399 + $0x28] sm:$0xff]
        %v453 = vld [vmem:[%s399 + $0x30] sm:$0xff]
        %v454 = vld [vmem:[%s399 + $0x38] sm:$0xff]
        %v455 = vld [vmem:[%s399 + $0x40] sm:$0xff]
        %v456 = vld [vmem:[%s399 + $0x48] sm:$0xff]
        %v457 = vld [vmem:[%s399 + $0x50] sm:$0xff]
        %v458 = vld [vmem:[%s399 + $0x58] sm:$0xff]
        %v459 = vld [vmem:[%s399 + $0x60] sm:$0xff]
        %v460 = vld [vmem:[%s399 + $0x68] sm:$0xff]
        %v461 = vld [vmem:[%s399 + $0x70] sm:$0xff]
        %v462 = vld [vmem:[%s399 + $0x78] sm:$0xff]
        %v463 = vsub.f32 %v415, %v431
        %v464 = vsub.f32 %v416, %v432
        %v465 = vsub.f32 %v417, %v433
        %v466 = vsub.f32 %v418, %v434
        %v467 = vsub.f32 %v419, %v435
        %v468 = vsub.f32 %v420, %v436
        %v469 = vsub.f32 %v421, %v437
        %v470 = vsub.f32 %v422, %v438
        %v471 = vsub.f32 %v423, %v439
        %v472 = vsub.f32 %v424, %v440
        %v473 = vsub.f32 %v425, %v441
        %v474 = vsub.f32 %v426, %v442
        %v475 = vsub.f32 %v427, %v443
        %v476 = vsub.f32 %v428, %v444
        %v477 = vsub.f32 %v429, %v445
        %v478 = vsub.f32 %v430, %v446
        %v479 = vadd.f32 %v463, 1e-06
        %v480 = vadd.f32 %v464, 1e-06
        %v481 = vadd.f32 %v465, 1e-06
        %v482 = vadd.f32 %v466, 1e-06
        %v483 = vadd.f32 %v467, 1e-06
        %v484 = vadd.f32 %v468, 1e-06
        %v485 = vadd.f32 %v469, 1e-06
        %v486 = vadd.f32 %v470, 1e-06
        %v487 = vadd.f32 %v471, 1e-06
        %v488 = vadd.f32 %v472, 1e-06
        %v489 = vadd.f32 %v473, 1e-06
        %v490 = vadd.f32 %v474, 1e-06
        %v491 = vadd.f32 %v475, 1e-06
        %v492 = vadd.f32 %v476, 1e-06
        %v493 = vadd.f32 %v477, 1e-06
        %v494 = vadd.f32 %v478, 1e-06
        %v495 = vmul.f32 %v479, %v479
        %v496 = vmul.f32 %v480, %v480
        %v497 = vmul.f32 %v481, %v481
        %v498 = vmul.f32 %v482, %v482
        %v499 = vmul.f32 %v483, %v483
        %v500 = vmul.f32 %v484, %v484
        %v501 = vmul.f32 %v485, %v485
        %v502 = vmul.f32 %v486, %v486
        %v503 = vmul.f32 %v487, %v487
        %v504 = vmul.f32 %v488, %v488
        %v505 = vmul.f32 %v489, %v489
        %v506 = vmul.f32 %v490, %v490
        %v507 = vmul.f32 %v491, %v491
        %v508 = vmul.f32 %v492, %v492
        %v509 = vmul.f32 %v493, %v493
        %v510 = vmul.f32 %v494, %v494
        %vm511 = vcmask 261120
        %v512 = vsel %vm511, %v495, 0.0
        %513 = vadd.xlane.f32.xlu0 %v512
        %v514 = vpop.xlane.xlu0 %513
        %v515 = vsel %vm511, %v496, 0.0
        %516 = vadd.xlane.f32.xlu0 %v515
        %v517 = vpop.xlane.xlu0 %516
        %v518 = vsel %vm511, %v497, 0.0
        %519 = vadd.xlane.f32.xlu0 %v518
        %v520 = vpop.xlane.xlu0 %519
        %v521 = vsel %vm511, %v498, 0.0
        %522 = vadd.xlane.f32.xlu0 %v521
        %v523 = vpop.xlane.xlu0 %522
        %v524 = vsel %vm511, %v499, 0.0
        %525 = vadd.xlane.f32.xlu0 %v524
        %v526 = vpop.xlane.xlu0 %525
        %v527 = vsel %vm511, %v500, 0.0
        %528 = vadd.xlane.f32.xlu0 %v527
        %v529 = vpop.xlane.xlu0 %528
        %v530 = vsel %vm511, %v501, 0.0
        %531 = vadd.xlane.f32.xlu0 %v530
        %v532 = vpop.xlane.xlu0 %531
        %v533 = vsel %vm511, %v502, 0.0
        %534 = vadd.xlane.f32.xlu0 %v533
        %v535 = vpop.xlane.xlu0 %534
        %v536 = vsel %vm511, %v503, 0.0
        %537 = vadd.xlane.f32.xlu0 %v536
        %v538 = vpop.xlane.xlu0 %537
        %v539 = vsel %vm511, %v504, 0.0
        %540 = vadd.xlane.f32.xlu0 %v539
        %v541 = vpop.xlane.xlu0 %540
        %v542 = vsel %vm511, %v505, 0.0
        %543 = vadd.xlane.f32.xlu0 %v542
        %v544 = vpop.xlane.xlu0 %543
        %v545 = vsel %vm511, %v506, 0.0
        %546 = vadd.xlane.f32.xlu0 %v545
        %v547 = vpop.xlane.xlu0 %546
        %v548 = vsel %vm511, %v507, 0.0
        %549 = vadd.xlane.f32.xlu0 %v548
        %v550 = vpop.xlane.xlu0 %549
        %v551 = vsel %vm511, %v508, 0.0
        %552 = vadd.xlane.f32.xlu0 %v551
        %v553 = vpop.xlane.xlu0 %552
        %v554 = vsel %vm511, %v509, 0.0
        %555 = vadd.xlane.f32.xlu0 %v554
        %v556 = vpop.xlane.xlu0 %555
        %v557 = vsel %vm511, %v510, 0.0
        %558 = vadd.xlane.f32.xlu0 %v557
        %v559 = vpop.xlane.xlu0 %558
        %v560 = vrsqrt.pop %v514
        %v561 = vmul.f32 %v514, %v560
        %vm562 = vcmp.eq.f32.partialorder %v514, inf
        %v563 = vsel %vm562, %v514, %v561
        %vm564 = vcmp.eq.f32.partialorder %v514, 0.0
        %v565 = vand.u32 %v514, 2147483648
        %v566 = vsel %vm564, %v565, %v563
        %v567 = vrsqrt.pop %v517
        %v568 = vmul.f32 %v517, %v567
        %vm569 = vcmp.eq.f32.partialorder %v517, inf
        %v570 = vsel %vm569, %v517, %v568
        %vm571 = vcmp.eq.f32.partialorder %v517, 0.0
        %v572 = vand.u32 %v517, 2147483648
        %v573 = vsel %vm571, %v572, %v570
        %v574 = vrsqrt.pop %v520
        %v575 = vmul.f32 %v520, %v574
        %vm576 = vcmp.eq.f32.partialorder %v520, inf
        %v577 = vsel %vm576, %v520, %v575
        %vm578 = vcmp.eq.f32.partialorder %v520, 0.0
        %v579 = vand.u32 %v520, 2147483648
        %v580 = vsel %vm578, %v579, %v577
        %v581 = vrsqrt.pop %v523
        %v582 = vmul.f32 %v523, %v581
        %vm583 = vcmp.eq.f32.partialorder %v523, inf
        %v584 = vsel %vm583, %v523, %v582
        %vm585 = vcmp.eq.f32.partialorder %v523, 0.0
        %v586 = vand.u32 %v523, 2147483648
        %v587 = vsel %vm585, %v586, %v584
        %v588 = vrsqrt.pop %v526
        %v589 = vmul.f32 %v526, %v588
        %vm590 = vcmp.eq.f32.partialorder %v526, inf
        %v591 = vsel %vm590, %v526, %v589
        %vm592 = vcmp.eq.f32.partialorder %v526, 0.0
        %v593 = vand.u32 %v526, 2147483648
        %v594 = vsel %vm592, %v593, %v591
        %v595 = vrsqrt.pop %v529
        %v596 = vmul.f32 %v529, %v595
        %vm597 = vcmp.eq.f32.partialorder %v529, inf
        %v598 = vsel %vm597, %v529, %v596
        %vm599 = vcmp.eq.f32.partialorder %v529, 0.0
        %v600 = vand.u32 %v529, 2147483648
        %v601 = vsel %vm599, %v600, %v598
        %v602 = vrsqrt.pop %v532
        %v603 = vmul.f32 %v532, %v602
        %vm604 = vcmp.eq.f32.partialorder %v532, inf
        %v605 = vsel %vm604, %v532, %v603
        %vm606 = vcmp.eq.f32.partialorder %v532, 0.0
        %v607 = vand.u32 %v532, 2147483648
        %v608 = vsel %vm606, %v607, %v605
        %v609 = vrsqrt.pop %v535
        %v610 = vmul.f32 %v535, %v609
        %vm611 = vcmp.eq.f32.partialorder %v535, inf
        %v612 = vsel %vm611, %v535, %v610
        %vm613 = vcmp.eq.f32.partialorder %v535, 0.0
        %v614 = vand.u32 %v535, 2147483648
        %v615 = vsel %vm613, %v614, %v612
        %v616 = vrsqrt.pop %v538
        %v617 = vmul.f32 %v538, %v616
        %vm618 = vcmp.eq.f32.partialorder %v538, inf
        %v619 = vsel %vm618, %v538, %v617
        %vm620 = vcmp.eq.f32.partialorder %v538, 0.0
        %v621 = vand.u32 %v538, 2147483648
        %v622 = vsel %vm620, %v621, %v619
        %v623 = vrsqrt.pop %v541
        %v624 = vmul.f32 %v541, %v623
        %vm625 = vcmp.eq.f32.partialorder %v541, inf
        %v626 = vsel %vm625, %v541, %v624
        %vm627 = vcmp.eq.f32.partialorder %v541, 0.0
        %v628 = vand.u32 %v541, 2147483648
        %v629 = vsel %vm627, %v628, %v626
        %v630 = vrsqrt.pop %v544
        %v631 = vmul.f32 %v544, %v630
        %vm632 = vcmp.eq.f32.partialorder %v544, inf
        %v633 = vsel %vm632, %v544, %v631
        %vm634 = vcmp.eq.f32.partialorder %v544, 0.0
        %v635 = vand.u32 %v544, 2147483648
        %v636 = vsel %vm634, %v635, %v633
        %v637 = vrsqrt.pop %v547
        %v638 = vmul.f32 %v547, %v637
        %vm639 = vcmp.eq.f32.partialorder %v547, inf
        %v640 = vsel %vm639, %v547, %v638
        %vm641 = vcmp.eq.f32.partialorder %v547, 0.0
        %v642 = vand.u32 %v547, 2147483648
        %v643 = vsel %vm641, %v642, %v640
        %v644 = vrsqrt.pop %v550
        %v645 = vmul.f32 %v550, %v644
        %vm646 = vcmp.eq.f32.partialorder %v550, inf
        %v647 = vsel %vm646, %v550, %v645
        %vm648 = vcmp.eq.f32.partialorder %v550, 0.0
        %v649 = vand.u32 %v550, 2147483648
        %v650 = vsel %vm648, %v649, %v647
        %v651 = vrsqrt.pop %v553
        %v652 = vmul.f32 %v553, %v651
        %vm653 = vcmp.eq.f32.partialorder %v553, inf
        %v654 = vsel %vm653, %v553, %v652
        %vm655 = vcmp.eq.f32.partialorder %v553, 0.0
        %v656 = vand.u32 %v553, 2147483648
        %v657 = vsel %vm655, %v656, %v654
        %v658 = vrsqrt.pop %v556
        %v659 = vmul.f32 %v556, %v658
        %vm660 = vcmp.eq.f32.partialorder %v556, inf
        %v661 = vsel %vm660, %v556, %v659
        %vm662 = vcmp.eq.f32.partialorder %v556, 0.0
        %v663 = vand.u32 %v556, 2147483648
        %v664 = vsel %vm662, %v663, %v661
        %v665 = vrsqrt.pop %v559
        %v666 = vmul.f32 %v559, %v665
        %vm667 = vcmp.eq.f32.partialorder %v559, inf
        %v668 = vsel %vm667, %v559, %v666
        %vm669 = vcmp.eq.f32.partialorder %v559, 0.0
        %v670 = vand.u32 %v559, 2147483648
        %v671 = vsel %vm669, %v670, %v668
        %v672 = vsub.f32 1.0, %v566
        %v673 = vsub.f32 1.0, %v573
        %v674 = vsub.f32 1.0, %v580
        %v675 = vsub.f32 1.0, %v587
        %v676 = vsub.f32 1.0, %v594
        %v677 = vsub.f32 1.0, %v601
        %v678 = vsub.f32 1.0, %v608
        %v679 = vsub.f32 1.0, %v615
        %v680 = vsub.f32 1.0, %v622
        %v681 = vsub.f32 1.0, %v629
        %v682 = vsub.f32 1.0, %v636
        %v683 = vsub.f32 1.0, %v643
        %v684 = vsub.f32 1.0, %v650
        %v685 = vsub.f32 1.0, %v657
        %v686 = vsub.f32 1.0, %v664
        %v687 = vsub.f32 1.0, %v671
        %v688 = vmax.f32 %v672, 0.0
        %v689 = vmax.f32 %v673, 0.0
        %v690 = vmax.f32 %v674, 0.0
        %v691 = vmax.f32 %v675, 0.0
        %v692 = vmax.f32 %v676, 0.0
        %v693 = vmax.f32 %v677, 0.0
        %v694 = vmax.f32 %v678, 0.0
        %v695 = vmax.f32 %v679, 0.0
        %v696 = vmax.f32 %v680, 0.0
        %v697 = vmax.f32 %v681, 0.0
        %v698 = vmax.f32 %v682, 0.0
        %v699 = vmax.f32 %v683, 0.0
        %v700 = vmax.f32 %v684, 0.0
        %v701 = vmax.f32 %v685, 0.0
        %v702 = vmax.f32 %v686, 0.0
        %v703 = vmax.f32 %v687, 0.0
        %v704 = vmul.f32 %v688, %v688
        %v705 = vmul.f32 %v689, %v689
        %v706 = vmul.f32 %v690, %v690
        %v707 = vmul.f32 %v691, %v691
        %v708 = vmul.f32 %v692, %v692
        %v709 = vmul.f32 %v693, %v693
        %v710 = vmul.f32 %v694, %v694
        %v711 = vmul.f32 %v695, %v695
        %v712 = vmul.f32 %v696, %v696
        %v713 = vmul.f32 %v697, %v697
        %v714 = vmul.f32 %v698, %v698
        %v715 = vmul.f32 %v699, %v699
        %v716 = vmul.f32 %v700, %v700
        %v717 = vmul.f32 %v701, %v701
        %v718 = vmul.f32 %v702, %v702
        %v719 = vmul.f32 %v703, %v703
        %v720 = vsub.f32 %v704, %v514
        %v721 = vsub.f32 %v705, %v517
        %v722 = vsub.f32 %v706, %v520
        %v723 = vsub.f32 %v707, %v523
        %v724 = vsub.f32 %v708, %v526
        %v725 = vsub.f32 %v709, %v529
        %v726 = vsub.f32 %v710, %v532
        %v727 = vsub.f32 %v711, %v535
        %v728 = vsub.f32 %v712, %v538
        %v729 = vsub.f32 %v713, %v541
        %v730 = vsub.f32 %v714, %v544
        %v731 = vsub.f32 %v715, %v547
        %v732 = vsub.f32 %v716, %v550
        %v733 = vsub.f32 %v717, %v553
        %v734 = vsub.f32 %v718, %v556
        %v735 = vsub.f32 %v719, %v559
        %v736 = vmul.f32 %v447, %v720
        %v737 = vmul.f32 %v448, %v721
        %v738 = vmul.f32 %v449, %v722
        %v739 = vmul.f32 %v450, %v723
        %v740 = vmul.f32 %v451, %v724
        %v741 = vmul.f32 %v452, %v725
        %v742 = vmul.f32 %v453, %v726
        %v743 = vmul.f32 %v454, %v727
        %v744 = vmul.f32 %v455, %v728
        %v745 = vmul.f32 %v456, %v729
        %v746 = vmul.f32 %v457, %v730
        %v747 = vmul.f32 %v458, %v731
        %v748 = vmul.f32 %v459, %v732
        %v749 = vmul.f32 %v460, %v733
        %v750 = vmul.f32 %v461, %v734
        %v751 = vmul.f32 %v462, %v735
        %v752 = vadd.f32 %v514, %v736
        %v753 = vadd.f32 %v517, %v737
        %v754 = vadd.f32 %v520, %v738
        %v755 = vadd.f32 %v523, %v739
        %v756 = vadd.f32 %v526, %v740
        %v757 = vadd.f32 %v529, %v741
        %v758 = vadd.f32 %v532, %v742
        %v759 = vadd.f32 %v535, %v743
        %v760 = vadd.f32 %v538, %v744
        %v761 = vadd.f32 %v541, %v745
        %v762 = vadd.f32 %v544, %v746
        %v763 = vadd.f32 %v547, %v747
        %v764 = vadd.f32 %v550, %v748
        %v765 = vadd.f32 %v553, %v749
        %v766 = vadd.f32 %v556, %v750
        %v767 = vadd.f32 %v559, %v751
        %vm768 = vcmp.gt.f32.partialorder %v514, 0.36
        %vm769 = vcmp.gt.f32.partialorder %v517, 0.36
        %vm770 = vcmp.gt.f32.partialorder %v520, 0.36
        %vm771 = vcmp.gt.f32.partialorder %v523, 0.36
        %vm772 = vcmp.gt.f32.partialorder %v526, 0.36
        %vm773 = vcmp.gt.f32.partialorder %v529, 0.36
        %vm774 = vcmp.gt.f32.partialorder %v532, 0.36
        %vm775 = vcmp.gt.f32.partialorder %v535, 0.36
        %vm776 = vcmp.gt.f32.partialorder %v538, 0.36
        %vm777 = vcmp.gt.f32.partialorder %v541, 0.36
        %vm778 = vcmp.gt.f32.partialorder %v544, 0.36
        %vm779 = vcmp.gt.f32.partialorder %v547, 0.36
        %vm780 = vcmp.gt.f32.partialorder %v550, 0.36
        %vm781 = vcmp.gt.f32.partialorder %v553, 0.36
        %vm782 = vcmp.gt.f32.partialorder %v556, 0.36
        %vm783 = vcmp.gt.f32.partialorder %v559, 0.36
        %v784 = vsel %vm768, 1, 0
        %v785 = vsel %vm769, 1, 0
        %v786 = vsel %vm770, 1, 0
        %v787 = vsel %vm771, 1, 0
        %v788 = vsel %vm772, 1, 0
        %v789 = vsel %vm773, 1, 0
        %v790 = vsel %vm774, 1, 0
        %v791 = vsel %vm775, 1, 0
        %v792 = vsel %vm776, 1, 0
        %v793 = vsel %vm777, 1, 0
        %v794 = vsel %vm778, 1, 0
        %v795 = vsel %vm779, 1, 0
        %v796 = vsel %vm780, 1, 0
        %v797 = vsel %vm781, 1, 0
        %v798 = vsel %vm782, 1, 0
        %v799 = vsel %vm783, 1, 0
        %v800 = vcvt.s32.f32 %v784
        %v801 = vcvt.s32.f32 %v785
        %v802 = vcvt.s32.f32 %v786
        %v803 = vcvt.s32.f32 %v787
        %v804 = vcvt.s32.f32 %v788
        %v805 = vcvt.s32.f32 %v789
        %v806 = vcvt.s32.f32 %v790
        %v807 = vcvt.s32.f32 %v791
        %v808 = vcvt.s32.f32 %v792
        %v809 = vcvt.s32.f32 %v793
        %v810 = vcvt.s32.f32 %v794
        %v811 = vcvt.s32.f32 %v795
        %v812 = vcvt.s32.f32 %v796
        %v813 = vcvt.s32.f32 %v797
        %v814 = vcvt.s32.f32 %v798
        %v815 = vcvt.s32.f32 %v799
        %vm816 = vcmp.eq.f32.partialorder %v800, %v447
        %vm817 = vcmp.eq.f32.partialorder %v801, %v448
        %vm818 = vcmp.eq.f32.partialorder %v802, %v449
        %vm819 = vcmp.eq.f32.partialorder %v803, %v450
        %vm820 = vcmp.eq.f32.partialorder %v804, %v451
        %vm821 = vcmp.eq.f32.partialorder %v805, %v452
        %vm822 = vcmp.eq.f32.partialorder %v806, %v453
        %vm823 = vcmp.eq.f32.partialorder %v807, %v454
        %vm824 = vcmp.eq.f32.partialorder %v808, %v455
        %vm825 = vcmp.eq.f32.partialorder %v809, %v456
        %vm826 = vcmp.eq.f32.partialorder %v810, %v457
        %vm827 = vcmp.eq.f32.partialorder %v811, %v458
        %vm828 = vcmp.eq.f32.partialorder %v812, %v459
        %vm829 = vcmp.eq.f32.partialorder %v813, %v460
        %vm830 = vcmp.eq.f32.partialorder %v814, %v461
        %vm831 = vcmp.eq.f32.partialorder %v815, %v462
        %v832 = vsel %vm816, 1, 0
        %v833 = vsel %vm817, 1, 0
        %v834 = vsel %vm818, 1, 0
        %v835 = vsel %vm819, 1, 0
        %v836 = vsel %vm820, 1, 0
        %v837 = vsel %vm821, 1, 0
        %v838 = vsel %vm822, 1, 0
        %v839 = vsel %vm823, 1, 0
        %v840 = vsel %vm824, 1, 0
        %v841 = vsel %vm825, 1, 0
        %v842 = vsel %vm826, 1, 0
        %v843 = vsel %vm827, 1, 0
        %v844 = vsel %vm828, 1, 0
        %v845 = vsel %vm829, 1, 0
        %v846 = vsel %vm830, 1, 0
        %v847 = vsel %vm831, 1, 0
        %v848 = vcvt.s32.f32 %v832
        %v849 = vcvt.s32.f32 %v833
        %v850 = vcvt.s32.f32 %v834
        %v851 = vcvt.s32.f32 %v835
        %v852 = vcvt.s32.f32 %v836
        %v853 = vcvt.s32.f32 %v837
        %v854 = vcvt.s32.f32 %v838
        %v855 = vcvt.s32.f32 %v839
        %v856 = vcvt.s32.f32 %v840
        %v857 = vcvt.s32.f32 %v841
        %v858 = vcvt.s32.f32 %v842
        %v859 = vcvt.s32.f32 %v843
        %v860 = vcvt.s32.f32 %v844
        %v861 = vcvt.s32.f32 %v845
        %v862 = vcvt.s32.f32 %v846
        %v863 = vcvt.s32.f32 %v847
        %s864 = smul.u32 %s26, 2
        %s865 = sadd.s32 %s864, %s27
        %v866 = vlaneseq
        %v867 = vshrl.u32 %v866, 7
        %v868 = vadd.s32 %v867, 8
        %v869 = vadd.s32 %v867, 16
        %v870 = vadd.s32 %v867, 24
        %v871 = vadd.s32 %v867, 32
        %v872 = vadd.s32 %v867, 40
        %v873 = vadd.s32 %v867, 48
        %v874 = vadd.s32 %v867, 56
        %v875 = vadd.s32 %v867, 64
        %v876 = vadd.s32 %v867, 72
        %v877 = vadd.s32 %v867, 80
        %v878 = vadd.s32 %v867, 88
        %v879 = vadd.s32 %v867, 96
        %v880 = vadd.s32 %v867, 104
        %v881 = vadd.s32 %v867, 112
        %v882 = vadd.s32 %v867, 120
        %s883 = smul.u32 %s865, 128
        %v884 = vstv %s883
        %v885 = vadd.s32 %v867, %v884
        %v886 = vadd.s32 %v868, %v884
        %v887 = vadd.s32 %v869, %v884
        %v888 = vadd.s32 %v870, %v884
        %v889 = vadd.s32 %v871, %v884
        %v890 = vadd.s32 %v872, %v884
        %v891 = vadd.s32 %v873, %v884
        %v892 = vadd.s32 %v874, %v884
        %v893 = vadd.s32 %v875, %v884
        %v894 = vadd.s32 %v876, %v884
        %v895 = vadd.s32 %v877, %v884
        %v896 = vadd.s32 %v878, %v884
        %v897 = vadd.s32 %v879, %v884
        %v898 = vadd.s32 %v880, %v884
        %v899 = vadd.s32 %v881, %v884
        %v900 = vadd.s32 %v882, %v884
        %vm901 = vcmp.lt.s32.totalorder %v885, 300
        %vm902 = vcmp.lt.s32.totalorder %v886, 300
        %vm903 = vcmp.lt.s32.totalorder %v887, 300
        %vm904 = vcmp.lt.s32.totalorder %v888, 300
        %vm905 = vcmp.lt.s32.totalorder %v889, 300
        %vm906 = vcmp.lt.s32.totalorder %v890, 300
        %vm907 = vcmp.lt.s32.totalorder %v891, 300
        %vm908 = vcmp.lt.s32.totalorder %v892, 300
        %vm909 = vcmp.lt.s32.totalorder %v893, 300
        %vm910 = vcmp.lt.s32.totalorder %v894, 300
        %vm911 = vcmp.lt.s32.totalorder %v895, 300
        %vm912 = vcmp.lt.s32.totalorder %v896, 300
        %vm913 = vcmp.lt.s32.totalorder %v897, 300
        %vm914 = vcmp.lt.s32.totalorder %v898, 300
        %vm915 = vcmp.lt.s32.totalorder %v899, 300
        %vm916 = vcmp.lt.s32.totalorder %v900, 300
        %v917 = vsel %vm901, %v752, 0.0
        %v918 = vsel %vm902, %v753, 0.0
        %v919 = vsel %vm903, %v754, 0.0
        %v920 = vsel %vm904, %v755, 0.0
        %v921 = vsel %vm905, %v756, 0.0
        %v922 = vsel %vm906, %v757, 0.0
        %v923 = vsel %vm907, %v758, 0.0
        %v924 = vsel %vm908, %v759, 0.0
        %v925 = vsel %vm909, %v760, 0.0
        %v926 = vsel %vm910, %v761, 0.0
        %v927 = vsel %vm911, %v762, 0.0
        %v928 = vsel %vm912, %v763, 0.0
        %v929 = vsel %vm913, %v764, 0.0
        %v930 = vsel %vm914, %v765, 0.0
        %v931 = vsel %vm915, %v766, 0.0
        %v932 = vsel %vm916, %v767, 0.0
        %vm933 = vcmask 7168
        %v934 = vsel %vm933, %v917, 0.0
        %v935 = vsel %vm933, %v918, 0.0
        %v936 = vadd.f32 %v934, %v935
        %v937 = vsel %vm933, %v919, 0.0
        %v938 = vadd.f32 %v936, %v937
        %v939 = vsel %vm933, %v920, 0.0
        %v940 = vadd.f32 %v938, %v939
        %v941 = vsel %vm933, %v921, 0.0
        %v942 = vadd.f32 %v940, %v941
        %v943 = vsel %vm933, %v922, 0.0
        %v944 = vadd.f32 %v942, %v943
        %v945 = vsel %vm933, %v923, 0.0
        %v946 = vadd.f32 %v944, %v945
        %v947 = vsel %vm933, %v924, 0.0
        %v948 = vadd.f32 %v946, %v947
        %v949 = vsel %vm933, %v925, 0.0
        %v950 = vadd.f32 %v948, %v949
        %v951 = vsel %vm933, %v926, 0.0
        %v952 = vadd.f32 %v950, %v951
        %v953 = vsel %vm933, %v927, 0.0
        %v954 = vadd.f32 %v952, %v953
        %v955 = vsel %vm933, %v928, 0.0
        %v956 = vadd.f32 %v954, %v955
        %v957 = vsel %vm933, %v929, 0.0
        %v958 = vadd.f32 %v956, %v957
        %v959 = vsel %vm933, %v930, 0.0
        %v960 = vadd.f32 %v958, %v959
        %v961 = vsel %vm933, %v931, 0.0
        %v962 = vadd.f32 %v960, %v961
        %v963 = vsel %vm933, %v932, 0.0
        %v964 = vadd.f32 %v962, %v963
        %965 = vadd.xlane.f32.xlu0 %v964
        %v966 = vpop.xlane.xlu0 %965
        %v967 = vrot.slane %v966, 4
        %v968 = vadd.f32 %v966, %v967
        %v969 = vrot.slane %v968, 2
        %v970 = vadd.f32 %v968, %v969
        %v971 = vrot.slane %v970, 1
        %v972 = vadd.f32 %v970, %v971
        %s973 = vtos %v972
        %v974 = vsel %vm901, %v848, 0.0
        %v975 = vsel %vm902, %v849, 0.0
        %v976 = vsel %vm903, %v850, 0.0
        %v977 = vsel %vm904, %v851, 0.0
        %v978 = vsel %vm905, %v852, 0.0
        %v979 = vsel %vm906, %v853, 0.0
        %v980 = vsel %vm907, %v854, 0.0
        %v981 = vsel %vm908, %v855, 0.0
        %v982 = vsel %vm909, %v856, 0.0
        %v983 = vsel %vm910, %v857, 0.0
        %v984 = vsel %vm911, %v858, 0.0
        %v985 = vsel %vm912, %v859, 0.0
        %v986 = vsel %vm913, %v860, 0.0
        %v987 = vsel %vm914, %v861, 0.0
        %v988 = vsel %vm915, %v862, 0.0
        %v989 = vsel %vm916, %v863, 0.0
        %v990 = vsel %vm933, %v974, 0.0
        %v991 = vsel %vm933, %v975, 0.0
        %v992 = vadd.f32 %v990, %v991
        %v993 = vsel %vm933, %v976, 0.0
        %v994 = vadd.f32 %v992, %v993
        %v995 = vsel %vm933, %v977, 0.0
        %v996 = vadd.f32 %v994, %v995
        %v997 = vsel %vm933, %v978, 0.0
        %v998 = vadd.f32 %v996, %v997
        %v999 = vsel %vm933, %v979, 0.0
        %v1000 = vadd.f32 %v998, %v999
        %v1001 = vsel %vm933, %v980, 0.0
        %v1002 = vadd.f32 %v1000, %v1001
        %v1003 = vsel %vm933, %v981, 0.0
        %v1004 = vadd.f32 %v1002, %v1003
        %v1005 = vsel %vm933, %v982, 0.0
        %v1006 = vadd.f32 %v1004, %v1005
        %v1007 = vsel %vm933, %v983, 0.0
        %v1008 = vadd.f32 %v1006, %v1007
        %v1009 = vsel %vm933, %v984, 0.0
        %v1010 = vadd.f32 %v1008, %v1009
        %v1011 = vsel %vm933, %v985, 0.0
        %v1012 = vadd.f32 %v1010, %v1011
        %v1013 = vsel %vm933, %v986, 0.0
        %v1014 = vadd.f32 %v1012, %v1013
        %v1015 = vsel %vm933, %v987, 0.0
        %v1016 = vadd.f32 %v1014, %v1015
        %v1017 = vsel %vm933, %v988, 0.0
        %v1018 = vadd.f32 %v1016, %v1017
        %v1019 = vsel %vm933, %v989, 0.0
        %v1020 = vadd.f32 %v1018, %v1019
        %1021 = vadd.xlane.f32.xlu0 %v1020
        %v1022 = vpop.xlane.xlu0 %1021
        %v1023 = vrot.slane %v1022, 4
        %v1024 = vadd.f32 %v1022, %v1023
        %v1025 = vrot.slane %v1024, 2
        %v1026 = vadd.f32 %v1024, %v1025
        %v1027 = vrot.slane %v1026, 1
        %v1028 = vadd.f32 %v1026, %v1027
        %s1029 = vtos %v1028
        %v1030 = vld [vmem:[%s335] sm:$0xff]
        %v1031 = vstv %s973
        %v1032 = vadd.f32 %v1030, %v1031
        %1033 = vst [vmem:[%s335] sm:$0xff] %v1032
        %v1034 = vld [vmem:[%s342] sm:$0xff]
        %v1035 = vstv %s1029
        %v1036 = vadd.f32 %v1034, %v1035
        %1037 = vst [vmem:[%s342] sm:$0xff] %v1036
        %s1038 = sand.u32 %s144, 1
        %s1039 = scalar_lea.sflag [#allocation3], %s1038
        %s1040 = sand.u32 %s144, 1
        %s1041 = smul.addr %s1040, 8
        %s1042 = scalar_lea.vmem [#allocation2], %s1041
        %s1043 = sand.u32 %s170, 1
        %s1044 = scalar_lea.sflag [#allocation5], %s1043
        %s1045 = sand.u32 %s170, 1
        %s1046 = smul.addr %s1045, 8
        %s1047 = scalar_lea.vmem [#allocation4], %s1046
        // Predicated region
        $region37: #{tpu_custom_call.1} parent=31 // pred_check
          %p1048 = pneg %p154
        $region38: #{tpu_custom_call.1} parent=31 // pred_check_branch
          %1050 = sbr.rel (%p1048) target = $region40
        $region39: #{tpu_custom_call.1} parent=31 // pred_region
          %s1052 = ssub.s32 128, 128
          %1053 = vsyncadd %s1039, %s1052
          %s1054 = smul.addr %s26, 128
          %s1055 = scalar_lea.hbm %s3, %s1054
          %s1057 = sshll.u32 %s1042, 4
          %s1058 = int_to_ptr.vmem [resolvable:$true] %s1057
          %1060 = dma.vmem_to_hbm [thread:$0]  %s1058, 128, %s1055, %s1039
        $region40: #{tpu_custom_call.1} parent=31 // pred_fallthru
          _
        // Predicated region
        $region41: #{tpu_custom_call.1} parent=31 // pred_check
          %p1061 = pneg %p180
        $region42: #{tpu_custom_call.1} parent=31 // pred_check_branch
          %1063 = sbr.rel (%p1061) target = $region44
        $region43: #{tpu_custom_call.1} parent=31 // pred_region
          %s1065 = ssub.s32 128, 128
          %1066 = vsyncadd %s1044, %s1065
          %s1067 = smul.addr %s26, 128
          %s1068 = scalar_lea.hbm %s4, %s1067
          %s1070 = sshll.u32 %s1047, 4
          %s1071 = int_to_ptr.vmem [resolvable:$true] %s1070
          %1073 = dma.vmem_to_hbm [thread:$0]  %s1071, 128, %s1068, %s1044
        $region44: #{tpu_custom_call.1} parent=31 // pred_fallthru
          _
      $region32: #{tpu_custom_call.1} parent=5 // pred_fallthru
        _
      %p1074 = scmp.le.s32.totalorder 2, %s17
      // Predicated region
      $region45: #{tpu_custom_call.1} parent=5 // pred_check
        %p1075 = pneg %p1074
      $region46: #{tpu_custom_call.1} parent=5 // pred_check_branch
        %1077 = sbr.rel (%p1075) target = $region48
      $region47: #{tpu_custom_call.1} parent=5 // pred_region
        %s1078 = ssub.s32 %s17, 2
        // Predicated region
        $region49: #{tpu_custom_call.1} parent=47 // pred_check
          %p1079 = pneg %p160
        $region50: #{tpu_custom_call.1} parent=47 // pred_check_branch
          %1081 = sbr.rel (%p1079) target = $region52
        $region51: #{tpu_custom_call.1} parent=47 // pred_region
          %s1082 = sand.u32 %s145, 1
          %s1083 = scalar_lea.sflag [#allocation3], %s1082
          %s1084 = sand.u32 %s145, 1
          %s1085 = smul.addr %s1084, 8
          %s1086 = scalar_lea.vmem [#allocation2], %s1085
          %1087 = dma.done %s1083, 128
        $region52: #{tpu_custom_call.1} parent=47 // pred_fallthru
          _
        // Predicated region
        $region53: #{tpu_custom_call.1} parent=47 // pred_check
          %p1088 = pneg %p186
        $region54: #{tpu_custom_call.1} parent=47 // pred_check_branch
          %1090 = sbr.rel (%p1088) target = $region56
        $region55: #{tpu_custom_call.1} parent=47 // pred_region
          %s1091 = sand.u32 %s171, 1
          %s1092 = scalar_lea.sflag [#allocation5], %s1091
          %s1093 = sand.u32 %s171, 1
          %s1094 = smul.addr %s1093, 8
          %s1095 = scalar_lea.vmem [#allocation4], %s1094
          %1096 = dma.done %s1092, 128
        $region56: #{tpu_custom_call.1} parent=47 // pred_fallthru
          _
      $region48: #{tpu_custom_call.1} parent=5 // pred_fallthru
        _
    $region6: #{tpu_custom_call.1} parent=1 // loop_footer
      %s21 = sadd.s32 1, %s17
    $region7: #{tpu_custom_call.1} parent=1 // loop_footer_branch
      %16 = sbr.rel target = $region3
    $region8: #{tpu_custom_call.1} parent=1 // loop_exit
      _
    %1097 = vsyncpa [#allocation3], 1
    %s1098 = scalar_lea.sflag [#allocation3], 1
    %1099 = vsyncpa %s1098, 1
    %1100 = vsyncpa [#allocation5], 1
    %s1101 = scalar_lea.sflag [#allocation5], 1
    %1102 = vsyncpa %s1101, 1

</llo_original>
